<compile_context>
chip_gen: v5e
topology: v5e:2x2
jax: 0.10.0
libtpu: 0.0.40
codegen_flags: <defaults>
</compile_context>

<pallas_src>
import jax
import jax.numpy as jnp
from jax.experimental import pallas as pl
from jax.experimental.pallas import tpu as pltpu


def _round_up(x, m):
    return ((x + m - 1) // m) * m


def _padded_bytes(shape, itemsize=4):
    """Bytes of a VMEM-resident array with last dim padded to 128 lanes, 2nd-last to 8."""
    s = list(shape)
    s[-1] = _round_up(s[-1], 128)
    if len(s) >= 2:
        s[-2] = _round_up(s[-2], 8)
    n = 1
    for v in s:
        n *= v
    return n * itemsize


def _vmem_estimate(tb, C, O, d, itemsize=4):
    """Padded VMEM estimate for one grid step (blocks double-buffered + kernel temps)."""
    K, L = C * d, d * d
    in_blk = _padded_bytes((tb, K, d), itemsize)
    out_blk = _padded_bytes((tb, O, L), itemsize)
    weights = (_padded_bytes((O, K), itemsize)
               + _padded_bytes((C, d, O), itemsize)
               + _padded_bytes((O, 1), 4))
    # f32 in-kernel temporaries: the two tile/repeat broadcast expansions (padded
    # (tb,O,d,d) layout), the lane-dense sum, and the small per-conv matrices.
    temps = (2 * tb * O * _round_up(d, 8) * _round_up(d, 128) * 4
             + _padded_bytes((tb, O, L), 4)
             + 4 * tb * _round_up(max(O, d), 8) * 128 * 4)
    return 2 * (in_blk + out_blk) + 2 * weights + temps


def _pick_batch_tile(B, C, O, d, itemsize=4, vmem_budget=24 * 1024 * 1024):
    """Batch tile: largest TB whose padded VMEM estimate fits the budget, capped so the
    cdiv grid is >= 2 (both v7x TensorCores) and preferring (even grid, TB | B, large TB)."""
    cap = 1
    for t in range(1, B + 1):
        if _vmem_estimate(t, C, O, d, itemsize) <= vmem_budget:
            cap = t
        else:
            break
    if B >= 2:
        cap = min(cap, -(-B // 2))           # keep grid >= 2
    best = None
    for t in range(cap, 0, -1):              # even grid AND divides B
        if (-(-B // t)) % 2 == 0 and B % t == 0:
            best = t
            break
    if best is None:
        for t in range(cap, 0, -1):          # even grid only
            if (-(-B // t)) % 2 == 0:
                best = t
                break
    if best is None:
        best = cap
    return best


def e2e_kernel(a1_ref, w1_ref, w2t_ref, bias_ref, out_ref):
    # a1_ref  : (TB, C*d, d)  activations, [b, c*d + h, w]
    # w1_ref  : (O, C*d)      (d,1)-conv weights, [o, c*d + h]
    # w2t_ref : (C, d, O)     (1,d)-conv weights, [c, w, o]
    # bias_ref: (O, 1)        b1 + b2
    # out_ref : (TB, O, d*d)  lane-dense flattened output, [b, o, h*d + w]
    TB, K, d = a1_ref.shape
    O = w1_ref.shape[0]
    C = K // d

    a1 = a1_ref[...]                                   # single load of the activation block

    # Column conv ((d,1) kernel): contract (c,h) with the 2D weights, TB-batched on the
    # MXU — no broadcast_to'd weight copies.
    a_col = jnp.einsum('ok,bkw->bow', w1_ref[...], a1,
                       preferred_element_type=jnp.float32)            # (TB, O, d) over w
    a_col = a_col + bias_ref[...][None]                # fold b1+b2 into the small tensor

    # Row conv ((1,d) kernel): contract the lane (w) axis per channel c, so the big
    # activation block is never transposed; only the tiny (d, O) result is.
    r_t = jnp.einsum('bhw,wo->bho', a1[:, 0:d, :], w2t_ref[0],
                     preferred_element_type=jnp.float32)              # (TB, d, O)
    for c in range(1, C):                              # static unroll, C is small
        r_t = r_t + jnp.einsum('bhw,wo->bho',
                               a1[:, c * d:(c + 1) * d, :], w2t_ref[c],
                               preferred_element_type=jnp.float32)
    r_row = jnp.transpose(r_t, (0, 2, 1))              # (TB, O, d) over h (small transpose)

    # Lane-dense assembly: expand the two small (TB,O,d) tensors straight to (TB,O,d*d)
    # (tile -> w varies fastest, repeat -> h constant over each d-run) and do ONE dense
    # VPU add; no padded (TB,O,d,d) temp and no relayout of the big tensor before store.
    out = jnp.tile(a_col, (1, 1, d)) + jnp.repeat(r_row, d, axis=-1)  # (TB, O, d*d)
    out_ref[...] = out.astype(out_ref.dtype)


def e2e_forward(A, W1, b1, W2, b2):
    """A: (B, C, d, d) NCHW.  W1: (O, C, d, 1), W2: (O, C, 1, d) (PyTorch conv layouts)."""
    B, C, H, W = A.shape
    assert H == W
    d = H
    O = W1.shape[0]
    K = C * d
    itemsize = jnp.dtype(A.dtype).itemsize

    # Layout prep: A is only reshaped (free, contiguous); only the tiny weight tensors
    # get a one-time transpose outside the kernel.
    A1 = A.reshape(B, K, d)                                   # [b, c*d + h, w]
    W1f = W1.reshape(O, K)                                    # [o, c*d + h]
    W2t = jnp.transpose(W2[:, :, 0, :], (1, 2, 0))            # (C, d, O): [c, w, o]
    bias = (b1 + b2).reshape(O, 1).astype(jnp.float32)

    TB = _pick_batch_tile(B, C, O, d, itemsize=itemsize)
    grid = pl.cdiv(B, TB)
    vmem_limit = int(min(48 * 1024 * 1024,
                         max(2 * _vmem_estimate(TB, C, O, d, itemsize),
                             16 * 1024 * 1024)))

    out_flat = pl.pallas_call(
        e2e_kernel,
        out_shape=jax.ShapeDtypeStruct((B, O, d * d), A.dtype),
        grid_spec=pltpu.PrefetchScalarGridSpec(
            num_scalar_prefetch=0,
            grid=(grid,),
            in_specs=[
                pl.BlockSpec((TB, K, d), lambda i: (i, 0, 0)),
                pl.BlockSpec((O, K), lambda i: (0, 0)),         # resident weights
                pl.BlockSpec((C, d, O), lambda i: (0, 0, 0)),   # resident weights
                pl.BlockSpec((O, 1), lambda i: (0, 0)),         # resident bias
            ],
            out_specs=pl.BlockSpec((TB, O, d * d), lambda i: (i, 0, 0)),
        ),
        compiler_params=pltpu.CompilerParams(
            dimension_semantics=("parallel",),                  # batch grid splits across TCs
            vmem_limit_bytes=vmem_limit),
    )(A1, W1f, W2t, bias)

    return out_flat.reshape(B, O, d, d)                        # free reshape: h*d + w -> (h, w)


def e2e_reference(A, W1, b1, W2, b2):
    a = jnp.einsum("bchw,och->bow", A, W1[..., 0]) + b1[None, :, None]       # (B, O, W)
    r = jnp.einsum("bchw,ocw->boh", A, W2[:, :, 0, :]) + b2[None, :, None]   # (B, O, H)
    return a[:, :, None, :] + r[:, :, :, None]


if __name__ == "__main__":
    # Small shapes consistent with the module (original uses d=116; demo uses d=16).
    B, C, O, d = 2, 4, 8, 16

    key = jax.random.PRNGKey(0)
    k_a, k_w1, k_b1, k_w2, k_b2 = jax.random.split(key, 5)

    A = jax.random.normal(k_a, (B, C, d, d), dtype=jnp.float32)
    scale = 1.0 / jnp.sqrt(jnp.float32(C * d))
    W1 = jax.random.normal(k_w1, (O, C, d, 1), dtype=jnp.float32) * scale
    b1 = jax.random.normal(k_b1, (O,), dtype=jnp.float32) * scale
    W2 = jax.random.normal(k_w2, (O, C, 1, d), dtype=jnp.float32) * scale
    b2 = jax.random.normal(k_b2, (O,), dtype=jnp.float32) * scale

    out = jax.block_until_ready(e2e_forward(A, W1, b1, W2, b2))
    ref = e2e_reference(A, W1, b1, W2, b2)

    assert out.shape == (B, O, d, d)
    assert jnp.allclose(out, ref, atol=1e-4, rtol=1e-4), "mismatch vs reference"

    # TODO(synk): optional bf16 storage (f32 accumulation kept via preferred_element_type)
    # would ~halve HBM traffic on v6e/v7x for this bandwidth-bound op, but it changes the
    # module's f32 output dtype, so it is not enabled here.
    print("KERNEL_OK")
</pallas_src>

<mosaic_0001>
module attributes {stable_mosaic.version = 11 : i64} {
  func.func @e2e_kernel(%arg0: i32, %arg1: memref<1x64x16xf32, #tpu.memory_space<vmem>>, %arg2: memref<8x64xf32, #tpu.memory_space<vmem>>, %arg3: memref<4x16x8xf32, #tpu.memory_space<vmem>>, %arg4: memref<8x1xf32, #tpu.memory_space<vmem>>, %arg5: memref<1x8x256xf32, #tpu.memory_space<vmem>>) attributes {dimension_semantics = [#tpu.dimension_semantics<parallel>], iteration_bounds = array<i64: 2>, scalar_prefetch = 0 : i64, scratch_operands = 0 : i64, tpu.core_type = #tpu.core_type<tc>, window_params = [{transform_indices = @transform_0, window_bounds = array<i64: 1, 64, 16>}, {pipeline_mode = #tpu.pipeline_mode<synchronous>, transform_indices = @transform_1, window_bounds = array<i64: 8, 64>}, {pipeline_mode = #tpu.pipeline_mode<synchronous>, transform_indices = @transform_2, window_bounds = array<i64: 4, 16, 8>}, {pipeline_mode = #tpu.pipeline_mode<synchronous>, transform_indices = @transform_3, window_bounds = array<i64: 8, 1>}, {transform_indices = @transform_4, window_bounds = array<i64: 1, 8, 256>}]} {
    %c0 = arith.constant 0 : index
    %c0_0 = arith.constant 0 : index
    %c0_1 = arith.constant 0 : index
    %0 = vector.load %arg1[%c0, %c0_0, %c0_1] : memref<1x64x16xf32, #tpu.memory_space<vmem>>, vector<1x64x16xf32>
    %c0_2 = arith.constant 0 : index
    %c0_3 = arith.constant 0 : index
    %1 = vector.load %arg2[%c0_2, %c0_3] : memref<8x64xf32, #tpu.memory_space<vmem>>, vector<8x64xf32>
    "tpu.trace_start"() <{level = 10 : i32, message = "ok,bkw->bow"}> : () -> ()
    %cst = arith.constant dense<0.000000e+00> : vector<1x16x8xf32>
    %2 = tpu.matmul %0, %1, %cst {dimension_numbers = #tpu.dot_dimension_numbers<[1], [1], [0, 2], [0], [0, 0, 0, 2, 1, 0], [], []>} : vector<1x64x16xf32>, vector<8x64xf32>, vector<1x16x8xf32> -> vector<1x16x8xf32>
    %3 = tpu.transpose %2, [0, 2, 1] : vector<1x16x8xf32> -> vector<1x8x16xf32>
    "tpu.trace_stop"() : () -> ()
    %c0_4 = arith.constant 0 : index
    %c0_5 = arith.constant 0 : index
    %4 = vector.load %arg4[%c0_4, %c0_5] : memref<8x1xf32, #tpu.memory_space<vmem>>, vector<8x1xf32>
    %5 = vector.shape_cast %4 : vector<8x1xf32> to vector<1x8x1xf32>
    %6 = vector.broadcast %5 : vector<1x8x1xf32> to vector<1x8x16xf32>
    %7 = arith.addf %3, %6 : vector<1x8x16xf32>
    %8 = vector.extract_strided_slice %0 {offsets = [0, 0, 0], sizes = [1, 16, 16], strides = [1, 1, 1]} : vector<1x64x16xf32> to vector<1x16x16xf32>
    %c0_6 = arith.constant 0 : index
    %c0_7 = arith.constant 0 : index
    %c0_8 = arith.constant 0 : index
    %9 = vector.load %arg3[%c0_6, %c0_7, %c0_8] : memref<4x16x8xf32, #tpu.memory_space<vmem>>, vector<1x16x8xf32>
    %10 = vector.shape_cast %9 : vector<1x16x8xf32> to vector<16x8xf32>
    "tpu.trace_start"() <{level = 10 : i32, message = "bhw,wo->bho"}> : () -> ()
    %cst_9 = arith.constant dense<0.000000e+00> : vector<1x16x8xf32>
    %11 = tpu.matmul %8, %10, %cst_9 {dimension_numbers = #tpu.dot_dimension_numbers<[2], [0], [0, 1], [1], [0, 0, 0, 1, 1, 1], [], []>} : vector<1x16x16xf32>, vector<16x8xf32>, vector<1x16x8xf32> -> vector<1x16x8xf32>
    "tpu.trace_stop"() : () -> ()
    %12 = vector.extract_strided_slice %0 {offsets = [0, 16, 0], sizes = [1, 16, 16], strides = [1, 1, 1]} : vector<1x64x16xf32> to vector<1x16x16xf32>
    %c1 = arith.constant 1 : index
    %c0_10 = arith.constant 0 : index
    %c0_11 = arith.constant 0 : index
    %13 = vector.load %arg3[%c1, %c0_10, %c0_11] : memref<4x16x8xf32, #tpu.memory_space<vmem>>, vector<1x16x8xf32>
    %14 = vector.shape_cast %13 : vector<1x16x8xf32> to vector<16x8xf32>
    "tpu.trace_start"() <{level = 10 : i32, message = "bhw,wo->bho"}> : () -> ()
    %cst_12 = arith.constant dense<0.000000e+00> : vector<1x16x8xf32>
    %15 = tpu.matmul %12, %14, %cst_12 {dimension_numbers = #tpu.dot_dimension_numbers<[2], [0], [0, 1], [1], [0, 0, 0, 1, 1, 1], [], []>} : vector<1x16x16xf32>, vector<16x8xf32>, vector<1x16x8xf32> -> vector<1x16x8xf32>
    "tpu.trace_stop"() : () -> ()
    %16 = arith.addf %11, %15 : vector<1x16x8xf32>
    %17 = vector.extract_strided_slice %0 {offsets = [0, 32, 0], sizes = [1, 16, 16], strides = [1, 1, 1]} : vector<1x64x16xf32> to vector<1x16x16xf32>
    %c2 = arith.constant 2 : index
    %c0_13 = arith.constant 0 : index
    %c0_14 = arith.constant 0 : index
    %18 = vector.load %arg3[%c2, %c0_13, %c0_14] : memref<4x16x8xf32, #tpu.memory_space<vmem>>, vector<1x16x8xf32>
    %19 = vector.shape_cast %18 : vector<1x16x8xf32> to vector<16x8xf32>
    "tpu.trace_start"() <{level = 10 : i32, message = "bhw,wo->bho"}> : () -> ()
    %cst_15 = arith.constant dense<0.000000e+00> : vector<1x16x8xf32>
    %20 = tpu.matmul %17, %19, %cst_15 {dimension_numbers = #tpu.dot_dimension_numbers<[2], [0], [0, 1], [1], [0, 0, 0, 1, 1, 1], [], []>} : vector<1x16x16xf32>, vector<16x8xf32>, vector<1x16x8xf32> -> vector<1x16x8xf32>
    "tpu.trace_stop"() : () -> ()
    %21 = arith.addf %16, %20 : vector<1x16x8xf32>
    %22 = vector.extract_strided_slice %0 {offsets = [0, 48, 0], sizes = [1, 16, 16], strides = [1, 1, 1]} : vector<1x64x16xf32> to vector<1x16x16xf32>
    %c3 = arith.constant 3 : index
    %c0_16 = arith.constant 0 : index
    %c0_17 = arith.constant 0 : index
    %23 = vector.load %arg3[%c3, %c0_16, %c0_17] : memref<4x16x8xf32, #tpu.memory_space<vmem>>, vector<1x16x8xf32>
    %24 = vector.shape_cast %23 : vector<1x16x8xf32> to vector<16x8xf32>
    "tpu.trace_start"() <{level = 10 : i32, message = "bhw,wo->bho"}> : () -> ()
    %cst_18 = arith.constant dense<0.000000e+00> : vector<1x16x8xf32>
    %25 = tpu.matmul %22, %24, %cst_18 {dimension_numbers = #tpu.dot_dimension_numbers<[2], [0], [0, 1], [1], [0, 0, 0, 1, 1, 1], [], []>} : vector<1x16x16xf32>, vector<16x8xf32>, vector<1x16x8xf32> -> vector<1x16x8xf32>
    "tpu.trace_stop"() : () -> ()
    %26 = arith.addf %21, %25 : vector<1x16x8xf32>
    %27 = tpu.transpose %26, [0, 2, 1] : vector<1x16x8xf32> -> vector<1x8x16xf32>
    %28 = tpu.concatenate %7, %7, %7, %7, %7, %7, %7, %7, %7, %7, %7, %7, %7, %7, %7, %7 in 2 : vector<1x8x16xf32>, vector<1x8x16xf32>, vector<1x8x16xf32>, vector<1x8x16xf32>, vector<1x8x16xf32>, vector<1x8x16xf32>, vector<1x8x16xf32>, vector<1x8x16xf32>, vector<1x8x16xf32>, vector<1x8x16xf32>, vector<1x8x16xf32>, vector<1x8x16xf32>, vector<1x8x16xf32>, vector<1x8x16xf32>, vector<1x8x16xf32>, vector<1x8x16xf32> -> vector<1x8x256xf32>
    %29 = vector.shape_cast %27 : vector<1x8x16xf32> to vector<1x8x16x1xf32>
    %30 = vector.broadcast %29 : vector<1x8x16x1xf32> to vector<1x8x16x16xf32>
    %31 = vector.shape_cast %30 : vector<1x8x16x16xf32> to vector<1x8x256xf32>
    %32 = arith.addf %28, %31 : vector<1x8x256xf32>
    %c0_19 = arith.constant 0 : index
    %c0_20 = arith.constant 0 : index
    %c0_21 = arith.constant 0 : index
    %33 = vector.load %arg5[%c0_19, %c0_20, %c0_21] : memref<1x8x256xf32, #tpu.memory_space<vmem>>, vector<1x8x256xf32>
    tpu.vector_store %arg5[%c0_19, %c0_20, %c0_21], %32 {strides = array<i32>} : memref<1x8x256xf32, #tpu.memory_space<vmem>>, vector<1x8x256xf32>,
    return
  }
  func.func @transform_0(%arg0: i32) -> (i32, i32, i32) {
    %c0_i32 = arith.constant 0 : i32
    %c0_i32_0 = arith.constant 0 : i32
    %c0_i32_1 = arith.constant 0 : i32
    return %arg0, %c0_i32, %c0_i32_0 : i32, i32, i32
  }
  func.func @transform_1(%arg0: i32) -> (i32, i32) {
    %c0_i32 = arith.constant 0 : i32
    %c0_i32_0 = arith.constant 0 : i32
    %c0_i32_1 = arith.constant 0 : i32
    return %c0_i32, %c0_i32_0 : i32, i32
  }
  func.func @transform_2(%arg0: i32) -> (i32, i32, i32) {
    %c0_i32 = arith.constant 0 : i32
    %c0_i32_0 = arith.constant 0 : i32
    %c0_i32_1 = arith.constant 0 : i32
    %c0_i32_2 = arith.constant 0 : i32
    return %c0_i32, %c0_i32_0, %c0_i32_1 : i32, i32, i32
  }
  func.func @transform_3(%arg0: i32) -> (i32, i32) {
    %c0_i32 = arith.constant 0 : i32
    %c0_i32_0 = arith.constant 0 : i32
    %c0_i32_1 = arith.constant 0 : i32
    return %c0_i32, %c0_i32_0 : i32, i32
  }
  func.func @transform_4(%arg0: i32) -> (i32, i32, i32) {
    %c0_i32 = arith.constant 0 : i32
    %c0_i32_0 = arith.constant 0 : i32
    %c0_i32_1 = arith.constant 0 : i32
    return %arg0, %c0_i32, %c0_i32_0 : i32, i32, i32
  }
}

</mosaic_0001>

<llo_original>
// kernel: tpu_custom_call.1
$region0: #{tpu_custom_call.1}
  #allocation0 [shape = 'u32[]', space=smem, size = 0x4, offset = 0x4, fixed_abs, tag = 'smem constant byte address 0x4 - core index']
  #allocation1 [shape = 'u32[72,128]{1,0:T(1,128)}', space=vmem, size = 0x9000, scoped, tag = 'internal scratch']
  %s0 = inlined_call_operand.vmem [shape: f32[2,64,16], index: 0, kind: input, shape index: {}]
  %s1 = inlined_call_operand.vmem [shape: f32[8,64], index: 1, kind: input, shape index: {}]
  %s2 = inlined_call_operand.vmem [shape: f32[4,16,8], index: 2, kind: input, shape index: {}]
  %s3 = inlined_call_operand.vmem [shape: f32[8,1], index: 3, kind: input, shape index: {}]
  %s4 = inlined_call_operand.hbm [shape: f32[2,8,256], index: 4, kind: output, shape index: {}]
  %s5 = sld [smem:[#allocation0]]
  $region49: #{tpu_custom_call.1} parent=0
    _
  %s7 = ssub.s32 1, %s5
  %s8 = scalar_select 0, %s7, %s5
  $region1: #{tpu_custom_call.1} parent=0
    #allocation2 [shape = 'u8[16384]{0}', space=vmem, size = 0x4000, scoped, tag = 'output window, operand 0']
    #allocation3 [shape = 's32[2]{0}', space=sflag, size = 0x8, scoped, tag = 'scoped memory for tpu_custom_call.1']
    %9 = vsyncpa [#allocation3], 0
    %s10 = scalar_lea.sflag [#allocation3], 1
    %11 = vsyncpa %s10, 0
    loop: start=0, step=1, limit=4
    $region2: #{tpu_custom_call.1} parent=1 // loop_pre_header
      _
    $region3: #{tpu_custom_call.1} parent=1 // loop_header
      %s13 = sphi 0, %s17
      %p14 = scmp.ge.s32.totalorder %s13, 4
      %s23 = sphi 0, %s25
      %s26 = sphi 0, %s23
      %s27 = sphi 0, %s26
      %s43 = sphi 0, %s27
      %s47 = sphi 0, %s47
      %s49 = sphi 0, %s47
      %s50 = sphi 0, %s49
      %s64 = sphi 0, %s50
      %s68 = sphi 0, %s68
      %s70 = sphi 0, %s68
      %s71 = sphi 0, %s70
      %s85 = sphi 0, %s71
      %s89 = sphi 0, %s89
      %s91 = sphi 0, %s89
      %s92 = sphi 0, %s91
      %s106 = sphi 0, %s92
      %s112 = sphi 0, %s114
      %s115 = sphi 0, %s112
      %s116 = sphi 0, %s115
      %s132 = sphi 0, %s116
    $region4: #{tpu_custom_call.1} parent=1 // loop_header_branch
      %16 = sbr.rel (%p14) target = $region8
    $region5: #{tpu_custom_call.1} parent=1 // loop_body
      %s18 = ssub.s32 %s13, 1
      %s19 = ssub.s32 %s13, 2
      %s20 = sadd.s32 %s13, 1
      %s21 = ssub.s32 %s13, %s20
      %p22 = scmp.eq.s32.totalorder %s21, 0
      %s24 = sadd.s32 %s23, 1
      %s25 = scalar_select %p22, %s23, %s24
      %p28 = pneg %p22
      %p29 = scmp.eq.s32.totalorder %s13, 1
      %p30 = por %p28, %p29
      %p31 = scmp.ne.s32.totalorder %s23, %s26
      %p32 = scmp.eq.s32.totalorder %s13, 0
      %p33 = por %p31, %p32
      %p34 = scmp.ne.s32.totalorder %s23, %s26
      %p35 = scmp.eq.s32.totalorder %s18, 1
      %p36 = por %p34, %p35
      %p37 = scmp.ne.s32.totalorder %s26, %s27
      %p38 = scmp.eq.s32.totalorder %s18, 0
      %p39 = por %p37, %p38
      %p40 = scmp.ne.s32.totalorder %s26, %s27
      %p41 = scmp.eq.s32.totalorder %s19, 1
      %p42 = por %p40, %p41
      %p44 = scmp.ne.s32.totalorder %s27, %s43
      %p45 = scmp.eq.s32.totalorder %s19, 0
      %p46 = por %p44, %p45
      %s48 = sadd.s32 %s47, 1
      %p51 = scmp.eq.s32.totalorder %s13, 1
      %p52 = scmp.ne.s32.totalorder %s47, %s49
      %p53 = scmp.eq.s32.totalorder %s13, 0
      %p54 = por %p52, %p53
      %p55 = scmp.ne.s32.totalorder %s47, %s49
      %p56 = scmp.eq.s32.totalorder %s18, 1
      %p57 = por %p55, %p56
      %p58 = scmp.ne.s32.totalorder %s49, %s50
      %p59 = scmp.eq.s32.totalorder %s18, 0
      %p60 = por %p58, %p59
      %p61 = scmp.ne.s32.totalorder %s49, %s50
      %p62 = scmp.eq.s32.totalorder %s19, 1
      %p63 = por %p61, %p62
      %p65 = scmp.ne.s32.totalorder %s50, %s64
      %p66 = scmp.eq.s32.totalorder %s19, 0
      %p67 = por %p65, %p66
      %s69 = sadd.s32 %s68, 1
      %p72 = scmp.eq.s32.totalorder %s13, 1
      %p73 = scmp.ne.s32.totalorder %s68, %s70
      %p74 = scmp.eq.s32.totalorder %s13, 0
      %p75 = por %p73, %p74
      %p76 = scmp.ne.s32.totalorder %s68, %s70
      %p77 = scmp.eq.s32.totalorder %s18, 1
      %p78 = por %p76, %p77
      %p79 = scmp.ne.s32.totalorder %s70, %s71
      %p80 = scmp.eq.s32.totalorder %s18, 0
      %p81 = por %p79, %p80
      %p82 = scmp.ne.s32.totalorder %s70, %s71
      %p83 = scmp.eq.s32.totalorder %s19, 1
      %p84 = por %p82, %p83
      %p86 = scmp.ne.s32.totalorder %s71, %s85
      %p87 = scmp.eq.s32.totalorder %s19, 0
      %p88 = por %p86, %p87
      %s90 = sadd.s32 %s89, 1
      %p93 = scmp.eq.s32.totalorder %s13, 1
      %p94 = scmp.ne.s32.totalorder %s89, %s91
      %p95 = scmp.eq.s32.totalorder %s13, 0
      %p96 = por %p94, %p95
      %p97 = scmp.ne.s32.totalorder %s89, %s91
      %p98 = scmp.eq.s32.totalorder %s18, 1
      %p99 = por %p97, %p98
      %p100 = scmp.ne.s32.totalorder %s91, %s92
      %p101 = scmp.eq.s32.totalorder %s18, 0
      %p102 = por %p100, %p101
      %p103 = scmp.ne.s32.totalorder %s91, %s92
      %p104 = scmp.eq.s32.totalorder %s19, 1
      %p105 = por %p103, %p104
      %p107 = scmp.ne.s32.totalorder %s92, %s106
      %p108 = scmp.eq.s32.totalorder %s19, 0
      %p109 = por %p107, %p108
      %s110 = ssub.s32 %s13, %s20
      %p111 = scmp.eq.s32.totalorder %s110, 0
      %s113 = sadd.s32 %s112, 1
      %s114 = scalar_select %p111, %s112, %s113
      %p117 = pneg %p111
      %p118 = scmp.eq.s32.totalorder %s13, 1
      %p119 = por %p117, %p118
      %p120 = scmp.ne.s32.totalorder %s112, %s115
      %p121 = scmp.eq.s32.totalorder %s13, 0
      %p122 = por %p120, %p121
      %p123 = scmp.ne.s32.totalorder %s112, %s115
      %p124 = scmp.eq.s32.totalorder %s18, 1
      %p125 = por %p123, %p124
      %p126 = scmp.ne.s32.totalorder %s115, %s116
      %p127 = scmp.eq.s32.totalorder %s18, 0
      %p128 = por %p126, %p127
      %p129 = scmp.ne.s32.totalorder %s115, %s116
      %p130 = scmp.eq.s32.totalorder %s19, 1
      %p131 = por %p129, %p130
      %p133 = scmp.ne.s32.totalorder %s116, %s132
      %p134 = scmp.eq.s32.totalorder %s19, 0
      %p135 = por %p133, %p134
      %p136 = scmp.le.s32.totalorder 1, %s13
      %p137 = scmp.lt.s32.totalorder %s13, 3
      %p138 = pnand %p136, %p137
      %p139 = pneg %p138
      // Predicated region
      $region9: #{tpu_custom_call.1} parent=5 // pred_check
        _
      $region10: #{tpu_custom_call.1} parent=5 // pred_check_branch
        %141 = sbr.rel (%p138) target = $region12
      $region11: #{tpu_custom_call.1} parent=5 // pred_region
        %s142 = ssub.s32 %s13, 1
        // Predicated region
        $region13: #{tpu_custom_call.1} parent=11 // pred_check
          %p143 = pneg %p60
        $region14: #{tpu_custom_call.1} parent=11 // pred_check_branch
          %145 = sbr.rel (%p143) target = $region16
        $region15: #{tpu_custom_call.1} parent=11 // pred_region
          _
        $region16: #{tpu_custom_call.1} parent=11 // pred_fallthru
          _
        // Predicated region
        $region17: #{tpu_custom_call.1} parent=11 // pred_check
          %p146 = pneg %p81
        $region18: #{tpu_custom_call.1} parent=11 // pred_check_branch
          %148 = sbr.rel (%p146) target = $region20
        $region19: #{tpu_custom_call.1} parent=11 // pred_region
          _
        $region20: #{tpu_custom_call.1} parent=11 // pred_fallthru
          _
        // Predicated region
        $region21: #{tpu_custom_call.1} parent=11 // pred_check
          %p149 = pneg %p102
        $region22: #{tpu_custom_call.1} parent=11 // pred_check_branch
          %151 = sbr.rel (%p149) target = $region24
        $region23: #{tpu_custom_call.1} parent=11 // pred_region
          _
        $region24: #{tpu_custom_call.1} parent=11 // pred_fallthru
          _
      $region12: #{tpu_custom_call.1} parent=5 // pred_fallthru
        _
      %p152 = scmp.lt.s32.totalorder %s13, 2
      // Predicated region
      $region25: #{tpu_custom_call.1} parent=5 // pred_check
        %p153 = pneg %p152
      $region26: #{tpu_custom_call.1} parent=5 // pred_check_branch
        %155 = sbr.rel (%p153) target = $region28
      $region27: #{tpu_custom_call.1} parent=5 // pred_region
        // Predicated region
        $region29: #{tpu_custom_call.1} parent=27 // pred_check
          %p156 = pneg %p33
        $region30: #{tpu_custom_call.1} parent=27 // pred_check_branch
          %158 = sbr.rel (%p156) target = $region32
        $region31: #{tpu_custom_call.1} parent=27 // pred_region
          %p159 = scmp.lt.s32.totalorder %s13, 1
          %s160 = scalar_select %p159, %s13, 1
          %s161 = smul.addr %s160, 8
          %s162 = smul.addr %s161, 8
          %s163 = scalar_lea.vmem %s0, %s162
        $region32: #{tpu_custom_call.1} parent=27 // pred_fallthru
          _
      $region28: #{tpu_custom_call.1} parent=5 // pred_fallthru
        _
      %p164 = scmp.le.s32.totalorder 1, %s13
      %p165 = scmp.lt.s32.totalorder %s13, 3
      %p166 = pnand %p164, %p165
      %p167 = pneg %p166
      // Predicated region
      $region33: #{tpu_custom_call.1} parent=5 // pred_check
        _
      $region34: #{tpu_custom_call.1} parent=5 // pred_check_branch
        %169 = sbr.rel (%p166) target = $region36
      $region35: #{tpu_custom_call.1} parent=5 // pred_region
        %s170 = ssub.s32 %s13, 1
        %p171 = scmp.lt.s32.totalorder %s18, 1
        %s172 = scalar_select %p171, %s18, 1
        %s173 = smul.addr %s172, 8
        %s174 = smul.addr %s173, 8
        %s175 = scalar_lea.vmem %s0, %s174
        %p176 = pneg %p39
        %p177 = pneg %p36
        %p178 = pneg %p60
        %p179 = pneg %p57
        %p180 = pneg %p81
        %p181 = pneg %p78
        %p182 = pneg %p102
        %p183 = pneg %p99
        %p184 = pneg %p128
        %p185 = pneg %p125
        %s186 = sand.u32 %s115, 1
        %s187 = scalar_lea.sflag [#allocation3], %s186
        %s188 = sand.u32 %s115, 1
        %s189 = smul.addr %s188, 16
        %s190 = scalar_lea.vmem [#allocation2], %s189
        %p191 = scmp.lt.s32.totalorder %s18, 1
        %s192 = scalar_select %p191, %s18, 1
        %s193 = smul.addr %s192, 8
        %s194 = smul.addr %s193, 8
        %s195 = scalar_lea.vmem %s0, %s194
        %v196 = vld [vmem:[%s195] sm:$0xff]
        %v197 = vld [vmem:[%s195 + $0x8] sm:$0xff]
        %v198 = vld [vmem:[%s195 + $0x10] sm:$0xff]
        %v199 = vld [vmem:[%s195 + $0x18] sm:$0xff]
        %v200 = vld [vmem:[%s195 + $0x20] sm:$0xff]
        %v201 = vld [vmem:[%s195 + $0x28] sm:$0xff]
        %v202 = vld [vmem:[%s195 + $0x30] sm:$0xff]
        %v203 = vld [vmem:[%s195 + $0x38] sm:$0xff]
        %v204 = vld [vmem:[%s1] sm:$0xff]
        %205 = vxpose.xlu0.b32.start [1/16] %v196, 128
        %206 = vxpose.xlu0.b32.cont [2/16] %v197, 128
        %207 = vxpose.xlu0.b32.cont [3/16] %v198, 128
        %208 = vxpose.xlu0.b32.cont [4/16] %v199, 128
        %209 = vxpose.xlu0.b32.cont [5/16] %v200, 128
        %210 = vxpose.xlu0.b32.cont [6/16] %v201, 128
        %211 = vxpose.xlu0.b32.cont [7/16] %v202, 128
        %212 = vxpose.xlu0.b32.cont [8/16] %v203, 128
        %213 = vxpose.xlu0.b32.cont [9/16] 0.0, 128
        %214 = vxpose.xlu0.b32.cont [10/16] 0.0, 128
        %215 = vxpose.xlu0.b32.cont [11/16] 0.0, 128
        %216 = vxpose.xlu0.b32.cont [12/16] 0.0, 128
        %217 = vxpose.xlu0.b32.cont [13/16] 0.0, 128
        %218 = vxpose.xlu0.b32.cont [14/16] 0.0, 128
        %219 = vxpose.xlu0.b32.cont [15/16] 0.0, 128
        %220 = vxpose.xlu0.b32.end [16/16] 0.0, 128
        %v221 = vpop.trf.xlu0
        %v222 = vpop.trf.xlu0
        %v223 = vpop.trf.xlu0
        %v224 = vpop.trf.xlu0
        %v225 = vpop.trf.xlu0
        %v226 = vpop.trf.xlu0
        %v227 = vpop.trf.xlu0
        %v228 = vpop.trf.xlu0
        %v229 = vpop.trf.xlu0
        %v230 = vpop.trf.xlu0
        %v231 = vpop.trf.xlu0
        %v232 = vpop.trf.xlu0
        %v233 = vpop.trf.xlu0
        %v234 = vpop.trf.xlu0
        %v235 = vpop.trf.xlu0
        %v236 = vpop.trf.xlu0
        %vm237 = vcmask 523264
        %v239 = vsel %vm237, %v221, 0
        %v242 = vsel %vm237, %v222, 0
        %v245 = vsel %vm237, %v204, 0
        %247 = vmatpush.xpose.msra.mxu0 0.0
        %248 = vmatpush.xpose.msra.mxu0 0.0
        %249 = vmatpush.xpose.msra.mxu0 0.0
        %250 = vmatpush.xpose.msra.mxu0 0.0
        %251 = vmatpush.xpose.msra.mxu0 0.0
        %252 = vmatpush.xpose.msra.mxu0 0.0
        %253 = vmatpush.xpose.msra.mxu0 0.0
        %254 = vmatpush.xpose.msra.mxu0 0.0
        %255 = vmatpush.xpose.msra.mxu0 0.0
        %256 = vmatpush.xpose.msra.mxu0 0.0
        %257 = vmatpush.xpose.msra.mxu0 0.0
        %258 = vmatpush.xpose.msra.mxu0 0.0
        %259 = vmatpush.xpose.msra.mxu0 0.0
        %260 = vmatpush.xpose.msra.mxu0 0.0
        %261 = vmatpush.xpose.msra.mxu0 0.0
        %262 = vmatpush.xpose.msra.mxu0 %v245
        %263 = vmatmul.f32.gmra.mxu0 %v239
        %v264 = vpop.f32.mrf.mxu0
        %v265 = vadd.f32 0.0, %v264
        %266 = vmatmul.f32.gmra.mxu0 %v242
        %v267 = vpop.f32.mrf.mxu0
        %v268 = vadd.f32 0.0, %v267
        %269 = vdwg.mxu0
        %270 = vxpose.xlu0.b32.start [1/16] %v265, 128
        %271 = vxpose.xlu0.b32.cont [2/16] %v268, 128
        %272 = vxpose.xlu0.b32.cont [3/16] 0.0, 128
        %273 = vxpose.xlu0.b32.cont [4/16] 0.0, 128
        %274 = vxpose.xlu0.b32.cont [5/16] 0.0, 128
        %275 = vxpose.xlu0.b32.cont [6/16] 0.0, 128
        %276 = vxpose.xlu0.b32.cont [7/16] 0.0, 128
        %277 = vxpose.xlu0.b32.cont [8/16] 0.0, 128
        %278 = vxpose.xlu0.b32.cont [9/16] 0.0, 128
        %279 = vxpose.xlu0.b32.cont [10/16] 0.0, 128
        %280 = vxpose.xlu0.b32.cont [11/16] 0.0, 128
        %281 = vxpose.xlu0.b32.cont [12/16] 0.0, 128
        %282 = vxpose.xlu0.b32.cont [13/16] 0.0, 128
        %283 = vxpose.xlu0.b32.cont [14/16] 0.0, 128
        %284 = vxpose.xlu0.b32.cont [15/16] 0.0, 128
        %285 = vxpose.xlu0.b32.end [16/16] 0.0, 128
        %v286 = vpop.trf.xlu0
        %v287 = vpop.trf.xlu0
        %v288 = vpop.trf.xlu0
        %v289 = vpop.trf.xlu0
        %v290 = vpop.trf.xlu0
        %v291 = vpop.trf.xlu0
        %v292 = vpop.trf.xlu0
        %v293 = vpop.trf.xlu0
        %v294 = vpop.trf.xlu0
        %v295 = vpop.trf.xlu0
        %v296 = vpop.trf.xlu0
        %v297 = vpop.trf.xlu0
        %v298 = vpop.trf.xlu0
        %v299 = vpop.trf.xlu0
        %v300 = vpop.trf.xlu0
        %v301 = vpop.trf.xlu0
        %v302 = vld [vmem:[%s3] sm:$0xff]
        %304 = vset.pattern.permute.xlu0 0
        %305 = vperm.xlu0 %304, %v302
        %v306 = vpop.permute.xlu0 %305
        %v308 = vadd.f32 %v286, %v306
        %v309 = vld [vmem:[%s2] sm:$0xff]
        %v310 = vld [vmem:[%s2 + $0x8] sm:$0xff]
        %s311 = scalar_lea.vmem %s2, 16
        %v312 = vld [vmem:[%s311] sm:$0xff]
        %v313 = vld [vmem:[%s311 + $0x8] sm:$0xff]
        %vm314 = vcmask 130048
        %v316 = vsel %vm314, %v198, 0
        %v319 = vsel %vm314, %v199, 0
        %321 = vmatpush.msra.mxu0 0.0
        %322 = vmatpush.msra.mxu0 0.0
        %323 = vmatpush.msra.mxu0 0.0
        %324 = vmatpush.msra.mxu0 0.0
        %325 = vmatpush.msra.mxu0 0.0
        %326 = vmatpush.msra.mxu0 0.0
        %327 = vmatpush.msra.mxu0 0.0
        %328 = vmatpush.msra.mxu0 0.0
        %329 = vmatpush.msra.mxu0 0.0
        %330 = vmatpush.msra.mxu0 0.0
        %331 = vmatpush.msra.mxu0 0.0
        %332 = vmatpush.msra.mxu0 0.0
        %333 = vmatpush.msra.mxu0 0.0
        %334 = vmatpush.msra.mxu0 0.0
        %335 = vmatpush.msra.mxu0 %v313
        %336 = vmatpush.msra.mxu0 %v312
        %337 = vmatmul.f32.gmra.mxu0 %v316
        %v338 = vpop.f32.mrf.mxu0
        %v339 = vadd.f32 0.0, %v338
        %340 = vmatmul.f32.gmra.mxu0 %v319
        %v341 = vpop.f32.mrf.mxu0
        %v342 = vadd.f32 0.0, %v341
        %343 = vdwg.mxu0
        %v345 = vsel %vm314, %v196, 0
        %v348 = vsel %vm314, %v197, 0
        %350 = vmatpush.msra.mxu0 0.0
        %351 = vmatpush.msra.mxu0 0.0
        %352 = vmatpush.msra.mxu0 0.0
        %353 = vmatpush.msra.mxu0 0.0
        %354 = vmatpush.msra.mxu0 0.0
        %355 = vmatpush.msra.mxu0 0.0
        %356 = vmatpush.msra.mxu0 0.0
        %357 = vmatpush.msra.mxu0 0.0
        %358 = vmatpush.msra.mxu0 0.0
        %359 = vmatpush.msra.mxu0 0.0
        %360 = vmatpush.msra.mxu0 0.0
        %361 = vmatpush.msra.mxu0 0.0
        %362 = vmatpush.msra.mxu0 0.0
        %363 = vmatpush.msra.mxu0 0.0
        %364 = vmatpush.msra.mxu0 %v310
        %365 = vmatpush.msra.mxu0 %v309
        %366 = vmatmul.f32.gmra.mxu0 %v345
        %v367 = vpop.f32.mrf.mxu0
        %v368 = vadd.f32 %v339, %v367
        %369 = vmatmul.f32.gmra.mxu0 %v348
        %v370 = vpop.f32.mrf.mxu0
        %v371 = vadd.f32 %v342, %v370
        %372 = vdwg.mxu0
        %s373 = scalar_lea.vmem %s2, 32
        %v374 = vld [vmem:[%s373] sm:$0xff]
        %v375 = vld [vmem:[%s373 + $0x8] sm:$0xff]
        %v377 = vsel %vm314, %v200, 0
        %v380 = vsel %vm314, %v201, 0
        %382 = vmatpush.msra.mxu0 0.0
        %383 = vmatpush.msra.mxu0 0.0
        %384 = vmatpush.msra.mxu0 0.0
        %385 = vmatpush.msra.mxu0 0.0
        %386 = vmatpush.msra.mxu0 0.0
        %387 = vmatpush.msra.mxu0 0.0
        %388 = vmatpush.msra.mxu0 0.0
        %389 = vmatpush.msra.mxu0 0.0
        %390 = vmatpush.msra.mxu0 0.0
        %391 = vmatpush.msra.mxu0 0.0
        %392 = vmatpush.msra.mxu0 0.0
        %393 = vmatpush.msra.mxu0 0.0
        %394 = vmatpush.msra.mxu0 0.0
        %395 = vmatpush.msra.mxu0 0.0
        %396 = vmatpush.msra.mxu0 %v375
        %397 = vmatpush.msra.mxu0 %v374
        %398 = vmatmul.f32.gmra.mxu0 %v377
        %v399 = vpop.f32.mrf.mxu0
        %v400 = vadd.f32 0.0, %v399
        %401 = vmatmul.f32.gmra.mxu0 %v380
        %v402 = vpop.f32.mrf.mxu0
        %v403 = vadd.f32 0.0, %v402
        %404 = vdwg.mxu0
        %v405 = vadd.f32 %v368, %v400
        %v406 = vadd.f32 %v371, %v403
        %s407 = scalar_lea.vmem %s2, 48
        %v408 = vld [vmem:[%s407] sm:$0xff]
        %v409 = vld [vmem:[%s407 + $0x8] sm:$0xff]
        %v411 = vsel %vm314, %v202, 0
        %v414 = vsel %vm314, %v203, 0
        %416 = vmatpush.msra.mxu0 0.0
        %417 = vmatpush.msra.mxu0 0.0
        %418 = vmatpush.msra.mxu0 0.0
        %419 = vmatpush.msra.mxu0 0.0
        %420 = vmatpush.msra.mxu0 0.0
        %421 = vmatpush.msra.mxu0 0.0
        %422 = vmatpush.msra.mxu0 0.0
        %423 = vmatpush.msra.mxu0 0.0
        %424 = vmatpush.msra.mxu0 0.0
        %425 = vmatpush.msra.mxu0 0.0
        %426 = vmatpush.msra.mxu0 0.0
        %427 = vmatpush.msra.mxu0 0.0
        %428 = vmatpush.msra.mxu0 0.0
        %429 = vmatpush.msra.mxu0 0.0
        %430 = vmatpush.msra.mxu0 %v409
        %431 = vmatpush.msra.mxu0 %v408
        %432 = vmatmul.f32.gmra.mxu0 %v411
        %v433 = vpop.f32.mrf.mxu0
        %v434 = vadd.f32 0.0, %v433
        %435 = vmatmul.f32.gmra.mxu0 %v414
        %v436 = vpop.f32.mrf.mxu0
        %v437 = vadd.f32 0.0, %v436
        %438 = vdwg.mxu0
        %v439 = vadd.f32 %v405, %v434
        %v440 = vadd.f32 %v406, %v437
        %441 = vxpose.xlu0.b32.start [1/16] %v439, 128
        %442 = vxpose.xlu0.b32.cont [2/16] %v440, 128
        %443 = vxpose.xlu0.b32.cont [3/16] 0.0, 128
        %444 = vxpose.xlu0.b32.cont [4/16] 0.0, 128
        %445 = vxpose.xlu0.b32.cont [5/16] 0.0, 128
        %446 = vxpose.xlu0.b32.cont [6/16] 0.0, 128
        %447 = vxpose.xlu0.b32.cont [7/16] 0.0, 128
        %448 = vxpose.xlu0.b32.cont [8/16] 0.0, 128
        %449 = vxpose.xlu0.b32.cont [9/16] 0.0, 128
        %450 = vxpose.xlu0.b32.cont [10/16] 0.0, 128
        %451 = vxpose.xlu0.b32.cont [11/16] 0.0, 128
        %452 = vxpose.xlu0.b32.cont [12/16] 0.0, 128
        %453 = vxpose.xlu0.b32.cont [13/16] 0.0, 128
        %454 = vxpose.xlu0.b32.cont [14/16] 0.0, 128
        %455 = vxpose.xlu0.b32.cont [15/16] 0.0, 128
        %456 = vxpose.xlu0.b32.end [16/16] 0.0, 128
        %v457 = vpop.trf.xlu0
        %v458 = vpop.trf.xlu0
        %v459 = vpop.trf.xlu0
        %v460 = vpop.trf.xlu0
        %v461 = vpop.trf.xlu0
        %v462 = vpop.trf.xlu0
        %v463 = vpop.trf.xlu0
        %v464 = vpop.trf.xlu0
        %v465 = vpop.trf.xlu0
        %v466 = vpop.trf.xlu0
        %v467 = vpop.trf.xlu0
        %v468 = vpop.trf.xlu0
        %v469 = vpop.trf.xlu0
        %v470 = vpop.trf.xlu0
        %v471 = vpop.trf.xlu0
        %v472 = vpop.trf.xlu0
        %474 = vrot.lane.b32.xlu0 %v308, 16
        %v475 = vpop.permute.xlu0 %474
        %477 = vrot.lane.b32.xlu0 %v308, 32
        %v478 = vpop.permute.xlu0 %477
        %480 = vrot.lane.b32.xlu0 %v308, 48
        %v481 = vpop.permute.xlu0 %480
        %483 = vrot.lane.b32.xlu0 %v308, 64
        %v484 = vpop.permute.xlu0 %483
        %486 = vrot.lane.b32.xlu0 %v308, 80
        %v487 = vpop.permute.xlu0 %486
        %489 = vrot.lane.b32.xlu0 %v308, 96
        %v490 = vpop.permute.xlu0 %489
        %492 = vrot.lane.b32.xlu0 %v308, 112
        %v493 = vpop.permute.xlu0 %492
        %v495 = vsel %vm314, %v308, %v475
        %vm496 = vcmask 261120
        %v497 = vsel %vm496, %v495, %v478
        %vm498 = vcmask 392192
        %v499 = vsel %vm498, %v497, %v481
        %v500 = vsel %vm237, %v499, %v484
        %vm501 = vcmask 654336
        %v502 = vsel %vm501, %v500, %v487
        %vm503 = vcmask 785408
        %v504 = vsel %vm503, %v502, %v490
        %vm505 = vcmask 916480
        %v506 = vsel %vm505, %v504, %v493
        %v507 = vperm.slane %v457, 0
        %v508 = vlaneseq
        %v509 = vshrl.u32 %v508, 7
        %511 = vset.pattern.permute.xlu0 %v509
        %512 = vperm.xlu0 %511, %v507
        %v513 = vpop.permute.xlu0 %512
        %v514 = vlaneseq
        %v515 = vshrl.u32 %v514, 7
        %v516 = vadd.s32 %v515, 8
        %517 = vset.pattern.permute.xlu0 %v516
        %518 = vperm.xlu0 %517, %v507
        %v519 = vpop.permute.xlu0 %518
        %v520 = vperm.slane %v457, 1
        %v521 = vlaneseq
        %v522 = vshrl.u32 %v521, 7
        %524 = vset.pattern.permute.xlu0 %v522
        %525 = vperm.xlu0 %524, %v520
        %v526 = vpop.permute.xlu0 %525
        %v527 = vlaneseq
        %v528 = vshrl.u32 %v527, 7
        %v529 = vadd.s32 %v528, 8
        %530 = vset.pattern.permute.xlu0 %v529
        %531 = vperm.xlu0 %530, %v520
        %v532 = vpop.permute.xlu0 %531
        %v533 = vperm.slane %v457, 2
        %v534 = vlaneseq
        %v535 = vshrl.u32 %v534, 7
        %537 = vset.pattern.permute.xlu0 %v535
        %538 = vperm.xlu0 %537, %v533
        %v539 = vpop.permute.xlu0 %538
        %v540 = vlaneseq
        %v541 = vshrl.u32 %v540, 7
        %v542 = vadd.s32 %v541, 8
        %543 = vset.pattern.permute.xlu0 %v542
        %544 = vperm.xlu0 %543, %v533
        %v545 = vpop.permute.xlu0 %544
        %v546 = vperm.slane %v457, 3
        %v547 = vlaneseq
        %v548 = vshrl.u32 %v547, 7
        %550 = vset.pattern.permute.xlu0 %v548
        %551 = vperm.xlu0 %550, %v546
        %v552 = vpop.permute.xlu0 %551
        %v553 = vlaneseq
        %v554 = vshrl.u32 %v553, 7
        %v555 = vadd.s32 %v554, 8
        %556 = vset.pattern.permute.xlu0 %v555
        %557 = vperm.xlu0 %556, %v546
        %v558 = vpop.permute.xlu0 %557
        %v559 = vperm.slane %v457, 4
        %v560 = vlaneseq
        %v561 = vshrl.u32 %v560, 7
        %563 = vset.pattern.permute.xlu0 %v561
        %564 = vperm.xlu0 %563, %v559
        %v565 = vpop.permute.xlu0 %564
        %v566 = vlaneseq
        %v567 = vshrl.u32 %v566, 7
        %v568 = vadd.s32 %v567, 8
        %569 = vset.pattern.permute.xlu0 %v568
        %570 = vperm.xlu0 %569, %v559
        %v571 = vpop.permute.xlu0 %570
        %v572 = vperm.slane %v457, 5
        %v573 = vlaneseq
        %v574 = vshrl.u32 %v573, 7
        %576 = vset.pattern.permute.xlu0 %v574
        %577 = vperm.xlu0 %576, %v572
        %v578 = vpop.permute.xlu0 %577
        %v579 = vlaneseq
        %v580 = vshrl.u32 %v579, 7
        %v581 = vadd.s32 %v580, 8
        %582 = vset.pattern.permute.xlu0 %v581
        %583 = vperm.xlu0 %582, %v572
        %v584 = vpop.permute.xlu0 %583
        %v585 = vperm.slane %v457, 6
        %v586 = vlaneseq
        %v587 = vshrl.u32 %v586, 7
        %589 = vset.pattern.permute.xlu0 %v587
        %590 = vperm.xlu0 %589, %v585
        %v591 = vpop.permute.xlu0 %590
        %v592 = vlaneseq
        %v593 = vshrl.u32 %v592, 7
        %v594 = vadd.s32 %v593, 8
        %595 = vset.pattern.permute.xlu0 %v594
        %596 = vperm.xlu0 %595, %v585
        %v597 = vpop.permute.xlu0 %596
        %v598 = vperm.slane %v457, 7
        %v599 = vlaneseq
        %v600 = vshrl.u32 %v599, 7
        %602 = vset.pattern.permute.xlu0 %v600
        %603 = vperm.xlu0 %602, %v598
        %v604 = vpop.permute.xlu0 %603
        %v605 = vlaneseq
        %v606 = vshrl.u32 %v605, 7
        %v607 = vadd.s32 %v606, 8
        %608 = vset.pattern.permute.xlu0 %v607
        %609 = vperm.xlu0 %608, %v598
        %v610 = vpop.permute.xlu0 %609
        %v611 = vrot.slane %v539, 4
        %vm612 = vcmask 1047556
        %v613 = vsel %vm612, %v611, %v513
        %v614 = vrot.slane %v513, 4
        %v615 = vsel %vm612, %v539, %v614
        %v617 = vunpack.c.l.s4 1983009808
        %v618 = vunpack.c.0.s8 %v617
        %v619 = vperm.slane %v613, %v618
        %v621 = vunpack.c.l.s4 1983009808
        %v622 = vunpack.c.0.s8 %v621
        %v623 = vperm.slane %v615, %v622
        %v624 = vrot.slane %v552, 4
        %v625 = vsel %vm612, %v624, %v526
        %v626 = vrot.slane %v526, 4
        %v627 = vsel %vm612, %v552, %v626
        %v629 = vunpack.c.l.s4 1983009808
        %v630 = vunpack.c.0.s8 %v629
        %v631 = vperm.slane %v625, %v630
        %v633 = vunpack.c.l.s4 1983009808
        %v634 = vunpack.c.0.s8 %v633
        %v635 = vperm.slane %v627, %v634
        %v636 = vrot.slane %v591, 4
        %v637 = vsel %vm612, %v636, %v565
        %v638 = vrot.slane %v565, 4
        %v639 = vsel %vm612, %v591, %v638
        %v641 = vunpack.c.l.s4 1983009808
        %v642 = vunpack.c.0.s8 %v641
        %v643 = vperm.slane %v637, %v642
        %v645 = vunpack.c.l.s4 1983009808
        %v646 = vunpack.c.0.s8 %v645
        %v647 = vperm.slane %v639, %v646
        %v648 = vrot.slane %v604, 4
        %v649 = vsel %vm612, %v648, %v578
        %v650 = vrot.slane %v578, 4
        %v651 = vsel %vm612, %v604, %v650
        %v653 = vunpack.c.l.s4 1983009808
        %v654 = vunpack.c.0.s8 %v653
        %v655 = vperm.slane %v649, %v654
        %v657 = vunpack.c.l.s4 1983009808
        %v658 = vunpack.c.0.s8 %v657
        %v659 = vperm.slane %v651, %v658
        %v660 = vrot.slane %v631, 4
        %v661 = vsel %vm612, %v660, %v619
        %v662 = vrot.slane %v619, 4
        %v663 = vsel %vm612, %v631, %v662
        %v665 = vunpack.c.l.s4 1934713408
        %v666 = vunpack.c.0.s8 %v665
        %v667 = vperm.slane %v661, %v666
        %v669 = vunpack.c.l.s4 1934713408
        %v670 = vunpack.c.0.s8 %v669
        %v671 = vperm.slane %v663, %v670
        %v672 = vrot.slane %v635, 4
        %v673 = vsel %vm612, %v672, %v623
        %v674 = vrot.slane %v623, 4
        %v675 = vsel %vm612, %v635, %v674
        %v677 = vunpack.c.l.s4 1934713408
        %v678 = vunpack.c.0.s8 %v677
        %v679 = vperm.slane %v673, %v678
        %v681 = vunpack.c.l.s4 1934713408
        %v682 = vunpack.c.0.s8 %v681
        %v683 = vperm.slane %v675, %v682
        %v684 = vrot.slane %v655, 4
        %v685 = vsel %vm612, %v684, %v643
        %v686 = vrot.slane %v643, 4
        %v687 = vsel %vm612, %v655, %v686
        %v689 = vunpack.c.l.s4 1934713408
        %v690 = vunpack.c.0.s8 %v689
        %v691 = vperm.slane %v685, %v690
        %v693 = vunpack.c.l.s4 1934713408
        %v694 = vunpack.c.0.s8 %v693
        %v695 = vperm.slane %v687, %v694
        %v696 = vrot.slane %v659, 4
        %v697 = vsel %vm612, %v696, %v647
        %v698 = vrot.slane %v647, 4
        %v699 = vsel %vm612, %v659, %v698
        %v701 = vunpack.c.l.s4 1934713408
        %v702 = vunpack.c.0.s8 %v701
        %v703 = vperm.slane %v697, %v702
        %v705 = vunpack.c.l.s4 1934713408
        %v706 = vunpack.c.0.s8 %v705
        %v707 = vperm.slane %v699, %v706
        %v708 = vrot.slane %v691, 4
        %v709 = vsel %vm612, %v708, %v667
        %v710 = vrot.slane %v667, 4
        %v711 = vsel %vm612, %v691, %v710
        %v712 = vrot.slane %v695, 4
        %v713 = vsel %vm612, %v712, %v671
        %v714 = vrot.slane %v671, 4
        %v715 = vsel %vm612, %v695, %v714
        %v716 = vrot.slane %v703, 4
        %v717 = vsel %vm612, %v716, %v679
        %v718 = vrot.slane %v679, 4
        %v719 = vsel %vm612, %v703, %v718
        %v720 = vrot.slane %v707, 4
        %v721 = vsel %vm612, %v720, %v683
        %v722 = vrot.slane %v683, 4
        %v723 = vsel %vm612, %v707, %v722
        %v724 = vrot.slane %v545, 4
        %v725 = vsel %vm612, %v724, %v519
        %v726 = vrot.slane %v519, 4
        %v727 = vsel %vm612, %v545, %v726
        %v729 = vunpack.c.l.s4 1983009808
        %v730 = vunpack.c.0.s8 %v729
        %v731 = vperm.slane %v725, %v730
        %v733 = vunpack.c.l.s4 1983009808
        %v734 = vunpack.c.0.s8 %v733
        %v735 = vperm.slane %v727, %v734
        %v736 = vrot.slane %v558, 4
        %v737 = vsel %vm612, %v736, %v532
        %v738 = vrot.slane %v532, 4
        %v739 = vsel %vm612, %v558, %v738
        %v741 = vunpack.c.l.s4 1983009808
        %v742 = vunpack.c.0.s8 %v741
        %v743 = vperm.slane %v737, %v742
        %v745 = vunpack.c.l.s4 1983009808
        %v746 = vunpack.c.0.s8 %v745
        %v747 = vperm.slane %v739, %v746
        %v748 = vrot.slane %v597, 4
        %v749 = vsel %vm612, %v748, %v571
        %v750 = vrot.slane %v571, 4
        %v751 = vsel %vm612, %v597, %v750
        %v753 = vunpack.c.l.s4 1983009808
        %v754 = vunpack.c.0.s8 %v753
        %v755 = vperm.slane %v749, %v754
        %v757 = vunpack.c.l.s4 1983009808
        %v758 = vunpack.c.0.s8 %v757
        %v759 = vperm.slane %v751, %v758
        %v760 = vrot.slane %v610, 4
        %v761 = vsel %vm612, %v760, %v584
        %v762 = vrot.slane %v584, 4
        %v763 = vsel %vm612, %v610, %v762
        %v765 = vunpack.c.l.s4 1983009808
        %v766 = vunpack.c.0.s8 %v765
        %v767 = vperm.slane %v761, %v766
        %v769 = vunpack.c.l.s4 1983009808
        %v770 = vunpack.c.0.s8 %v769
        %v771 = vperm.slane %v763, %v770
        %v772 = vrot.slane %v743, 4
        %v773 = vsel %vm612, %v772, %v731
        %v774 = vrot.slane %v731, 4
        %v775 = vsel %vm612, %v743, %v774
        %v777 = vunpack.c.l.s4 1934713408
        %v778 = vunpack.c.0.s8 %v777
        %v779 = vperm.slane %v773, %v778
        %v781 = vunpack.c.l.s4 1934713408
        %v782 = vunpack.c.0.s8 %v781
        %v783 = vperm.slane %v775, %v782
        %v784 = vrot.slane %v747, 4
        %v785 = vsel %vm612, %v784, %v735
        %v786 = vrot.slane %v735, 4
        %v787 = vsel %vm612, %v747, %v786
        %v789 = vunpack.c.l.s4 1934713408
        %v790 = vunpack.c.0.s8 %v789
        %v791 = vperm.slane %v785, %v790
        %v793 = vunpack.c.l.s4 1934713408
        %v794 = vunpack.c.0.s8 %v793
        %v795 = vperm.slane %v787, %v794
        %v796 = vrot.slane %v767, 4
        %v797 = vsel %vm612, %v796, %v755
        %v798 = vrot.slane %v755, 4
        %v799 = vsel %vm612, %v767, %v798
        %v801 = vunpack.c.l.s4 1934713408
        %v802 = vunpack.c.0.s8 %v801
        %v803 = vperm.slane %v797, %v802
        %v805 = vunpack.c.l.s4 1934713408
        %v806 = vunpack.c.0.s8 %v805
        %v807 = vperm.slane %v799, %v806
        %v808 = vrot.slane %v771, 4
        %v809 = vsel %vm612, %v808, %v759
        %v810 = vrot.slane %v759, 4
        %v811 = vsel %vm612, %v771, %v810
        %v813 = vunpack.c.l.s4 1934713408
        %v814 = vunpack.c.0.s8 %v813
        %v815 = vperm.slane %v809, %v814
        %v817 = vunpack.c.l.s4 1934713408
        %v818 = vunpack.c.0.s8 %v817
        %v819 = vperm.slane %v811, %v818
        %v820 = vrot.slane %v803, 4
        %v821 = vsel %vm612, %v820, %v779
        %v822 = vrot.slane %v779, 4
        %v823 = vsel %vm612, %v803, %v822
        %v824 = vrot.slane %v807, 4
        %v825 = vsel %vm612, %v824, %v783
        %v826 = vrot.slane %v783, 4
        %v827 = vsel %vm612, %v807, %v826
        %v828 = vrot.slane %v815, 4
        %v829 = vsel %vm612, %v828, %v791
        %v830 = vrot.slane %v791, 4
        %v831 = vsel %vm612, %v815, %v830
        %v832 = vrot.slane %v819, 4
        %v833 = vsel %vm612, %v832, %v795
        %v834 = vrot.slane %v795, 4
        %v835 = vsel %vm612, %v819, %v834
        %837 = vrot.lane.b32.xlu0 %v711, 16
        %v838 = vpop.permute.xlu0 %837
        %841 = vrot.lane.b32.xlu0 %v713, 32
        %v842 = vpop.permute.xlu0 %841
        %845 = vrot.lane.b32.xlu0 %v715, 48
        %v846 = vpop.permute.xlu0 %845
        %849 = vrot.lane.b32.xlu0 %v717, 64
        %v850 = vpop.permute.xlu0 %849
        %853 = vrot.lane.b32.xlu0 %v719, 80
        %v854 = vpop.permute.xlu0 %853
        %857 = vrot.lane.b32.xlu0 %v721, 96
        %v858 = vpop.permute.xlu0 %857
        %861 = vrot.lane.b32.xlu0 %v723, 112
        %v862 = vpop.permute.xlu0 %861
        %865 = vrot.lane.b32.xlu0 %v823, 16
        %v866 = vpop.permute.xlu0 %865
        %869 = vrot.lane.b32.xlu0 %v825, 32
        %v870 = vpop.permute.xlu0 %869
        %873 = vrot.lane.b32.xlu0 %v827, 48
        %v874 = vpop.permute.xlu0 %873
        %877 = vrot.lane.b32.xlu0 %v829, 64
        %v878 = vpop.permute.xlu0 %877
        %881 = vrot.lane.b32.xlu0 %v831, 80
        %v882 = vpop.permute.xlu0 %881
        %885 = vrot.lane.b32.xlu0 %v833, 96
        %v886 = vpop.permute.xlu0 %885
        %889 = vrot.lane.b32.xlu0 %v835, 112
        %v890 = vpop.permute.xlu0 %889
        %v892 = vsel %vm314, %v709, %v838
        %v893 = vsel %vm496, %v892, %v842
        %v894 = vsel %vm498, %v893, %v846
        %v895 = vsel %vm237, %v894, %v850
        %v896 = vsel %vm501, %v895, %v854
        %v897 = vsel %vm503, %v896, %v858
        %v898 = vsel %vm505, %v897, %v862
        %v899 = vsel %vm314, %v821, %v866
        %v900 = vsel %vm496, %v899, %v870
        %v901 = vsel %vm498, %v900, %v874
        %v902 = vsel %vm237, %v901, %v878
        %v903 = vsel %vm501, %v902, %v882
        %v904 = vsel %vm503, %v903, %v886
        %v905 = vsel %vm505, %v904, %v890
        %v906 = vadd.f32 %v506, %v898
        %v907 = vadd.f32 %v506, %v905
        %908 = vst [vmem:[%s190] sm:$0xff] %v906
        %909 = vst [vmem:[%s190 + $0x8] sm:$0xff] %v907
        %s910 = sand.u32 %s115, 1
        %s911 = scalar_lea.sflag [#allocation3], %s910
        %s912 = sand.u32 %s115, 1
        %s913 = smul.addr %s912, 16
        %s914 = scalar_lea.vmem [#allocation2], %s913
        // Predicated region
        $region37: #{tpu_custom_call.1} parent=35 // pred_check
          %p915 = pneg %p125
        $region38: #{tpu_custom_call.1} parent=35 // pred_check_branch
          %917 = sbr.rel (%p915) target = $region40
        $region39: #{tpu_custom_call.1} parent=35 // pred_region
          %919 = vsyncadd %s911, 0
          %s920 = smul.addr %s18, 2
          %s921 = smul.addr %s920, 8
          %s922 = scalar_lea.hbm %s4, %s921
          %s924 = sshll.u32 %s914, 4
          %s925 = int_to_ptr.vmem [resolvable:$true] %s924
          %s926 = sshll.u32 %s922, 4
          %s927 = int_to_ptr.hbm [resolvable:$true] %s926
          %929 = dma.vmem_to_hbm [thread:$0]  %s925, 256, %s927, %s911
        $region40: #{tpu_custom_call.1} parent=35 // pred_fallthru
          _
      $region36: #{tpu_custom_call.1} parent=5 // pred_fallthru
        _
      %p930 = scmp.le.s32.totalorder 2, %s13
      // Predicated region
      $region41: #{tpu_custom_call.1} parent=5 // pred_check
        %p931 = pneg %p930
      $region42: #{tpu_custom_call.1} parent=5 // pred_check_branch
        %933 = sbr.rel (%p931) target = $region44
      $region43: #{tpu_custom_call.1} parent=5 // pred_region
        %s934 = ssub.s32 %s13, 2
        // Predicated region
        $region45: #{tpu_custom_call.1} parent=43 // pred_check
          %p935 = pneg %p131
        $region46: #{tpu_custom_call.1} parent=43 // pred_check_branch
          %937 = sbr.rel (%p935) target = $region48
        $region47: #{tpu_custom_call.1} parent=43 // pred_region
          %s938 = sand.u32 %s116, 1
          %s939 = scalar_lea.sflag [#allocation3], %s938
          %s940 = sand.u32 %s116, 1
          %s941 = smul.addr %s940, 16
          %s942 = scalar_lea.vmem [#allocation2], %s941
          %944 = dma.done %s939, 256
        $region48: #{tpu_custom_call.1} parent=43 // pred_fallthru
          _
      $region44: #{tpu_custom_call.1} parent=5 // pred_fallthru
        _
    $region6: #{tpu_custom_call.1} parent=1 // loop_footer
      %s17 = sadd.s32 1, %s13
    $region7: #{tpu_custom_call.1} parent=1 // loop_footer_branch
      %12 = sbr.rel target = $region3
    $region8: #{tpu_custom_call.1} parent=1 // loop_exit
      _
    %945 = vsyncpa [#allocation3], 1
    %s946 = scalar_lea.sflag [#allocation3], 1
    %947 = vsyncpa %s946, 1

</llo_original>
